<compile_context>
chip_gen: v7x
topology: tpu7x:2x2x1
jax: 0.10.0
libtpu: 0.0.40
codegen_flags: <defaults>
</compile_context>

<pallas_src>
import jax
import jax.numpy as jnp
from jax.experimental import pallas as pl
from jax.experimental.pallas import tpu as pltpu

LANE = 128
TQ = 128                      # query-row tile (multiple of 8; 128 matches v5e MXU tiles too)
_NEG_INF = -1e30              # mask value for padded key columns
_VMEM_LIMIT = 48 * 1024 * 1024


def _round_up(x, m):
    return ((x + m - 1) // m) * m


# ----------------------- kernel 1: V = x @ W + b -----------------------
def value_proj_kernel(x_ref, w_ref, b_ref, v_ref):
    # x_ref: (1, TQ, Hp)   w_ref: (Hp, Hp)   b_ref: (1, Hp)   v_ref: (1, TQ, Hp)
    v = jnp.dot(x_ref[0], w_ref[...], preferred_element_type=jnp.float32)
    v = v + b_ref[...].astype(jnp.float32)
    v_ref[0] = v.astype(v_ref.dtype)


# ------------- kernel 2: out = softmax(attn) @ V @ W + b ---------------
def attn_out_kernel(attn_ref, v_ref, w_ref, b_ref, o_ref):
    # attn_ref: (1, TQ, Sp)  v_ref: (1, Sp, Hp)  w_ref: (Hp, Hp)
    # b_ref:    (1, Hp)      o_ref: (1, TQ, Hp)
    a = attn_ref[0].astype(jnp.float32)                       # softmax math in f32
    m = jnp.max(a, axis=-1, keepdims=True)                    # (TQ, 1)
    e = jnp.exp(a - m)                                        # (TQ, Sp)
    denom = jnp.sum(e, axis=-1, keepdims=True)                # (TQ, 1)

    # Unnormalized context; fold 1/denom into the (TQ, Hp) result instead of scaling (TQ, Sp).
    ctx = jnp.dot(e.astype(v_ref.dtype), v_ref[0],
                  preferred_element_type=jnp.float32)         # (TQ, Hp)
    ctx = ctx * pl.reciprocal(denom, approx=False)            # exact recip keeps 1e-5 tol

    out = jnp.dot(ctx.astype(w_ref.dtype), w_ref[...],
                  preferred_element_type=jnp.float32)         # (TQ, Hp)
    out = out + b_ref[...].astype(jnp.float32)
    o_ref[0] = out.astype(o_ref.dtype)


def attention_output(embedding, attention_matrix, weight, bias):
    """embedding: (B, S, H), attention_matrix: (B, S, S),
    weight: (H, H) laid out as (in, out), bias: (H,)."""
    B, S, H = embedding.shape
    dtype = embedding.dtype

    Hp = _round_up(H, LANE)
    Sp = _round_up(S, LANE)
    tq = min(TQ, Sp)
    assert Sp % tq == 0

    # Lane-dense padding.  Attention pads get -inf-ish so padded keys receive zero weight.
    emb_p = jnp.pad(embedding, ((0, 0), (0, Sp - S), (0, Hp - H)))
    w_p = jnp.pad(weight, ((0, Hp - H), (0, Hp - H)))
    b_p = jnp.pad(bias, (0, Hp - H)).reshape(1, Hp)
    attn_p = jnp.pad(attention_matrix, ((0, 0), (0, Sp - S), (0, Sp - S)),
                     constant_values=_NEG_INF)

    cparams = pltpu.CompilerParams(
        dimension_semantics=("parallel", "parallel"),
        vmem_limit_bytes=_VMEM_LIMIT,
    )

    grid = (B, Sp // tq)

    # --- pass 1: value projection, tiled over (batch, row tiles) ---
    v = pl.pallas_call(
        value_proj_kernel,
        out_shape=jax.ShapeDtypeStruct((B, Sp, Hp), dtype),
        grid=grid,
        in_specs=[
            pl.BlockSpec((1, tq, Hp), lambda b, i: (b, i, 0)),
            pl.BlockSpec((Hp, Hp), lambda b, i: (0, 0)),
            pl.BlockSpec((1, Hp), lambda b, i: (0, 0)),
        ],
        out_specs=pl.BlockSpec((1, tq, Hp), lambda b, i: (b, i, 0)),
        compiler_params=cparams,
    )(emb_p, w_p, b_p)

    # --- pass 2: softmax(attn) @ V, then output projection ---
    out_p = pl.pallas_call(
        attn_out_kernel,
        out_shape=jax.ShapeDtypeStruct((B, Sp, Hp), dtype),
        grid=grid,
        in_specs=[
            pl.BlockSpec((1, tq, Sp), lambda b, i: (b, i, 0)),   # attn query-row tile
            pl.BlockSpec((1, Sp, Hp), lambda b, i: (b, 0, 0)),   # full V, resident per batch
            pl.BlockSpec((Hp, Hp), lambda b, i: (0, 0)),
            pl.BlockSpec((1, Hp), lambda b, i: (0, 0)),
        ],
        out_specs=pl.BlockSpec((1, tq, Hp), lambda b, i: (b, i, 0)),
        compiler_params=cparams,
    )(attn_p, v, w_p, b_p)

    return out_p[:, :S, :H]


def reference(embedding, attention_matrix, weight, bias):
    v = embedding @ weight + bias
    a = jax.nn.softmax(attention_matrix, axis=-1)
    return (a @ v) @ weight + bias


if __name__ == "__main__":
    B, S, H = 2, 8, 32
    key = jax.random.PRNGKey(0)
    k_emb, k_attn, k_w, k_b = jax.random.split(key, 4)

    embedding = jax.random.normal(k_emb, (B, S, H), dtype=jnp.float32)
    attention_matrix = jax.random.normal(k_attn, (B, S, S), dtype=jnp.float32)

    # Deterministic Linear(n_hidden, n_hidden) params (torch-style uniform init).
    bound = 1.0 / jnp.sqrt(jnp.float32(H))
    # weight stored as (H_in, H_out), i.e. W^T of the torch parameter.
    weight = jax.random.uniform(k_w, (H, H), minval=-bound, maxval=bound,
                                dtype=jnp.float32)
    bias = jax.random.uniform(k_b, (H,), minval=-bound, maxval=bound,
                              dtype=jnp.float32)

    out = attention_output(embedding, attention_matrix, weight, bias)
    out = jax.block_until_ready(out)

    ref = reference(embedding, attention_matrix, weight, bias)
    assert out.shape == (B, S, H)
    assert jnp.allclose(out, ref, atol=1e-5, rtol=1e-5)
    print("KERNEL_OK")
</pallas_src>

<mosaic_0001>
module attributes {stable_mosaic.version = 11 : i64} {
  func.func @value_proj_kernel(%arg0: i32, %arg1: i32, %arg2: memref<1x128x128xf32, #tpu.memory_space<vmem>>, %arg3: memref<128x128xf32, #tpu.memory_space<vmem>>, %arg4: memref<1x128xf32, #tpu.memory_space<vmem>>, %arg5: memref<1x128x128xf32, #tpu.memory_space<vmem>>) attributes {dimension_semantics = [#tpu.dimension_semantics<parallel>, #tpu.dimension_semantics<parallel>], iteration_bounds = array<i64: 2, 1>, scalar_prefetch = 0 : i64, scratch_operands = 0 : i64, tpu.core_type = #tpu.core_type<tc>, window_params = [{transform_indices = @transform_0, window_bounds = array<i64: 1, 128, 128>}, {pipeline_mode = #tpu.pipeline_mode<synchronous>, transform_indices = @transform_1, window_bounds = array<i64: 128, 128>}, {pipeline_mode = #tpu.pipeline_mode<synchronous>, transform_indices = @transform_2, window_bounds = array<i64: 1, 128>}, {transform_indices = @transform_3, window_bounds = array<i64: 1, 128, 128>}]} {
    %c0 = arith.constant 0 : index
    %c0_0 = arith.constant 0 : index
    %c0_1 = arith.constant 0 : index
    %0 = vector.load %arg2[%c0, %c0_0, %c0_1] : memref<1x128x128xf32, #tpu.memory_space<vmem>>, vector<1x128x128xf32>
    %1 = vector.shape_cast %0 : vector<1x128x128xf32> to vector<128x128xf32>
    %c0_2 = arith.constant 0 : index
    %c0_3 = arith.constant 0 : index
    %2 = vector.load %arg3[%c0_2, %c0_3] : memref<128x128xf32, #tpu.memory_space<vmem>>, vector<128x128xf32>
    %cst = arith.constant dense<0.000000e+00> : vector<128x128xf32>
    %3 = tpu.matmul %1, %2, %cst {dimension_numbers = #tpu.dot_dimension_numbers<[1], [0], [0], [1], [0, 0, 1, 1], [], []>} : vector<128x128xf32>, vector<128x128xf32>, vector<128x128xf32> -> vector<128x128xf32>
    %c0_4 = arith.constant 0 : index
    %c0_5 = arith.constant 0 : index
    %4 = vector.load %arg4[%c0_4, %c0_5] : memref<1x128xf32, #tpu.memory_space<vmem>>, vector<1x128xf32>
    %5 = vector.broadcast %4 : vector<1x128xf32> to vector<128x128xf32>
    %6 = arith.addf %3, %5 : vector<128x128xf32>
    %c0_6 = arith.constant 0 : index
    %c0_7 = arith.constant 0 : index
    %c0_8 = arith.constant 0 : index
    %7 = vector.load %arg5[%c0_6, %c0_7, %c0_8] : memref<1x128x128xf32, #tpu.memory_space<vmem>>, vector<1x128x128xf32>
    %8 = vector.shape_cast %7 : vector<1x128x128xf32> to vector<128x128xf32>
    %9 = vector.shape_cast %6 : vector<128x128xf32> to vector<1x128x128xf32>
    tpu.vector_store %arg5[%c0_6, %c0_7, %c0_8], %9 {strides = array<i32>} : memref<1x128x128xf32, #tpu.memory_space<vmem>>, vector<1x128x128xf32>,
    return
  }
  func.func @transform_0(%arg0: i32, %arg1: i32) -> (i32, i32, i32) {
    %c0_i32 = arith.constant 0 : i32
    %c0_i32_0 = arith.constant 0 : i32
    return %arg0, %arg1, %c0_i32 : i32, i32, i32
  }
  func.func @transform_1(%arg0: i32, %arg1: i32) -> (i32, i32) {
    %c0_i32 = arith.constant 0 : i32
    %c0_i32_0 = arith.constant 0 : i32
    %c0_i32_1 = arith.constant 0 : i32
    return %c0_i32, %c0_i32_0 : i32, i32
  }
  func.func @transform_2(%arg0: i32, %arg1: i32) -> (i32, i32) {
    %c0_i32 = arith.constant 0 : i32
    %c0_i32_0 = arith.constant 0 : i32
    %c0_i32_1 = arith.constant 0 : i32
    return %c0_i32, %c0_i32_0 : i32, i32
  }
  func.func @transform_3(%arg0: i32, %arg1: i32) -> (i32, i32, i32) {
    %c0_i32 = arith.constant 0 : i32
    %c0_i32_0 = arith.constant 0 : i32
    return %arg0, %arg1, %c0_i32 : i32, i32, i32
  }
}

</mosaic_0001>

<llo_original>
// kernel: tpu_custom_call.1
$region0: #{tpu_custom_call.1}
  #allocation0 [shape = 'u32[]', space=smem, size = 0x4, offset = 0x4, fixed_abs, tag = 'smem constant byte address 0x4 - core index']
  #allocation1 [shape = 'u32[144,128]{1,0:T(1,128)}', space=vmem, size = 0x12000, scoped, tag = 'internal scratch']
  %s0 = inlined_call_operand.hbm [shape: f32[2,128,128], index: 0, kind: input, shape index: {}]
  %s1 = inlined_call_operand.hbm [shape: f32[128,128], index: 1, kind: input, shape index: {}]
  %s2 = inlined_call_operand.vmem [shape: f32[1,128], index: 2, kind: input, shape index: {}]
  %s3 = inlined_call_operand.hbm [shape: f32[2,128,128], index: 3, kind: output, shape index: {}]
  %s4 = sld [smem:[#allocation0]]
  $region53: #{tpu_custom_call.1} parent=0
    _
  %s6 = ssub.s32 1, %s4
  %s7 = scalar_select 0, %s6, %s4
  $region1: #{tpu_custom_call.1} parent=0
    #allocation2 [shape = 'u8[131072]{0}', space=vmem, size = 0x20000, scoped, tag = 'input window, operand 0']
    #allocation3 [shape = 's32[2]{0}', space=sflag, size = 0x8, scoped, tag = 'scoped memory for tpu_custom_call.1']
    #allocation4 [shape = 's32[2]{0}', space=sflag, size = 0x8, scoped, tag = 'scoped memory for tpu_custom_call.1']
    #allocation5 [shape = 'u8[65536]{0}', space=vmem, size = 0x10000, scoped, tag = 'input window, operand 1, single buffered']
    #allocation6 [shape = 's32[1]{0}', space=sflag, size = 0x4, scoped, tag = 'scoped memory for tpu_custom_call.1']
    #allocation7 [shape = 'u8[131072]{0}', space=vmem, size = 0x20000, scoped, tag = 'output window, operand 0']
    %8 = vsyncpa [#allocation3], 0
    %s9 = scalar_lea.sflag [#allocation3], 1
    %10 = vsyncpa %s9, 0
    %11 = vsyncpa [#allocation6], 0
    %12 = vsyncpa [#allocation4], 0
    %s13 = scalar_lea.sflag [#allocation4], 1
    %14 = vsyncpa %s13, 0
    loop: start=0, step=1, limit=4
    $region2: #{tpu_custom_call.1} parent=1 // loop_pre_header
      _
    $region3: #{tpu_custom_call.1} parent=1 // loop_header
      %s16 = sphi 0, %s20
      %p17 = scmp.ge.s32.totalorder %s16, 4
      %s23 = sphi 0, %s35
      %s24 = sphi 0, %s31
      %s25 = sphi 0, %s23
      %s26 = sphi 0, %s24
      %s27 = sphi 0, %s25
      %s28 = sphi 0, %s26
      %s40 = sphi 0, %s42
      %s43 = sphi 0, %s40
      %s44 = sphi 0, %s43
      %s60 = sphi 0, %s44
      %s64 = sphi 0, %s64
      %s66 = sphi 0, %s64
      %s67 = sphi 0, %s66
      %s81 = sphi 0, %s67
      %s85 = sphi 0, %s85
      %s87 = sphi 0, %s85
      %s88 = sphi 0, %s87
      %s102 = sphi 0, %s88
      %s110 = sphi 0, %s112
      %s113 = sphi 0, %s110
      %s114 = sphi 0, %s113
      %s130 = sphi 0, %s114
    $region4: #{tpu_custom_call.1} parent=1 // loop_header_branch
      %19 = sbr.rel (%p17) target = $region8
    $region5: #{tpu_custom_call.1} parent=1 // loop_body
      %s21 = ssub.s32 %s16, 1
      %s22 = ssub.s32 %s16, 2
      %s29 = sadd.s32 1, %s24
      %p30 = scmp.ge.s32.totalorder %s29, 1
      %s31 = scalar_select %p30, 0, %s29
      %s32 = sadd.s32 1, %s23
      %s33 = scalar_select %p30, %s32, %s23
      %p34 = scmp.ge.s32.totalorder %s33, 2
      %s35 = scalar_select %p34, 0, %s33
      %s36 = ssub.s32 %s23, %s35
      %s37 = ssub.s32 %s24, %s31
      %s38 = sor.u32 %s36, %s37
      %p39 = scmp.eq.s32.totalorder %s38, 0
      %s41 = sadd.s32 %s40, 1
      %s42 = scalar_select %p39, %s40, %s41
      %p45 = pneg %p39
      %p46 = scmp.eq.s32.totalorder %s16, 1
      %p47 = por %p45, %p46
      %p48 = scmp.ne.s32.totalorder %s40, %s43
      %p49 = scmp.eq.s32.totalorder %s16, 0
      %p50 = por %p48, %p49
      %p51 = scmp.ne.s32.totalorder %s40, %s43
      %p52 = scmp.eq.s32.totalorder %s21, 1
      %p53 = por %p51, %p52
      %p54 = scmp.ne.s32.totalorder %s43, %s44
      %p55 = scmp.eq.s32.totalorder %s21, 0
      %p56 = por %p54, %p55
      %p57 = scmp.ne.s32.totalorder %s43, %s44
      %p58 = scmp.eq.s32.totalorder %s22, 1
      %p59 = por %p57, %p58
      %p61 = scmp.ne.s32.totalorder %s44, %s60
      %p62 = scmp.eq.s32.totalorder %s22, 0
      %p63 = por %p61, %p62
      %s65 = sadd.s32 %s64, 1
      %p68 = scmp.eq.s32.totalorder %s16, 1
      %p69 = scmp.ne.s32.totalorder %s64, %s66
      %p70 = scmp.eq.s32.totalorder %s16, 0
      %p71 = por %p69, %p70
      %p72 = scmp.ne.s32.totalorder %s64, %s66
      %p73 = scmp.eq.s32.totalorder %s21, 1
      %p74 = por %p72, %p73
      %p75 = scmp.ne.s32.totalorder %s66, %s67
      %p76 = scmp.eq.s32.totalorder %s21, 0
      %p77 = por %p75, %p76
      %p78 = scmp.ne.s32.totalorder %s66, %s67
      %p79 = scmp.eq.s32.totalorder %s22, 1
      %p80 = por %p78, %p79
      %p82 = scmp.ne.s32.totalorder %s67, %s81
      %p83 = scmp.eq.s32.totalorder %s22, 0
      %p84 = por %p82, %p83
      %s86 = sadd.s32 %s85, 1
      %p89 = scmp.eq.s32.totalorder %s16, 1
      %p90 = scmp.ne.s32.totalorder %s85, %s87
      %p91 = scmp.eq.s32.totalorder %s16, 0
      %p92 = por %p90, %p91
      %p93 = scmp.ne.s32.totalorder %s85, %s87
      %p94 = scmp.eq.s32.totalorder %s21, 1
      %p95 = por %p93, %p94
      %p96 = scmp.ne.s32.totalorder %s87, %s88
      %p97 = scmp.eq.s32.totalorder %s21, 0
      %p98 = por %p96, %p97
      %p99 = scmp.ne.s32.totalorder %s87, %s88
      %p100 = scmp.eq.s32.totalorder %s22, 1
      %p101 = por %p99, %p100
      %p103 = scmp.ne.s32.totalorder %s88, %s102
      %p104 = scmp.eq.s32.totalorder %s22, 0
      %p105 = por %p103, %p104
      %s106 = ssub.s32 %s23, %s35
      %s107 = ssub.s32 %s24, %s31
      %s108 = sor.u32 %s106, %s107
      %p109 = scmp.eq.s32.totalorder %s108, 0
      %s111 = sadd.s32 %s110, 1
      %s112 = scalar_select %p109, %s110, %s111
      %p115 = pneg %p109
      %p116 = scmp.eq.s32.totalorder %s16, 1
      %p117 = por %p115, %p116
      %p118 = scmp.ne.s32.totalorder %s110, %s113
      %p119 = scmp.eq.s32.totalorder %s16, 0
      %p120 = por %p118, %p119
      %p121 = scmp.ne.s32.totalorder %s110, %s113
      %p122 = scmp.eq.s32.totalorder %s21, 1
      %p123 = por %p121, %p122
      %p124 = scmp.ne.s32.totalorder %s113, %s114
      %p125 = scmp.eq.s32.totalorder %s21, 0
      %p126 = por %p124, %p125
      %p127 = scmp.ne.s32.totalorder %s113, %s114
      %p128 = scmp.eq.s32.totalorder %s22, 1
      %p129 = por %p127, %p128
      %p131 = scmp.ne.s32.totalorder %s114, %s130
      %p132 = scmp.eq.s32.totalorder %s22, 0
      %p133 = por %p131, %p132
      %p134 = scmp.le.s32.totalorder 1, %s16
      %p135 = scmp.lt.s32.totalorder %s16, 3
      %p136 = pnand %p134, %p135
      %p137 = pneg %p136
      // Predicated region
      $region9: #{tpu_custom_call.1} parent=5 // pred_check
        _
      $region10: #{tpu_custom_call.1} parent=5 // pred_check_branch
        %139 = sbr.rel (%p136) target = $region12
      $region11: #{tpu_custom_call.1} parent=5 // pred_region
        %s140 = ssub.s32 %s16, 1
        // Predicated region
        $region13: #{tpu_custom_call.1} parent=11 // pred_check
          %p141 = pneg %p77
        $region14: #{tpu_custom_call.1} parent=11 // pred_check_branch
          %143 = sbr.rel (%p141) target = $region16
        $region15: #{tpu_custom_call.1} parent=11 // pred_region
          %s145 = ssub.s32 2048, 2048
          %146 = vsyncadd [#allocation6], %s145
          %s147 = sshll.u32 [#allocation5], 4
          %s148 = int_to_ptr.vmem [resolvable:$true] %s147
          %153 = dma.hbm_to_vmem [thread:$0]  %s1, 2048, %s148, [#allocation6], 128, 128, 8
        $region16: #{tpu_custom_call.1} parent=11 // pred_fallthru
          _
        // Predicated region
        $region17: #{tpu_custom_call.1} parent=11 // pred_check
          %p154 = pneg %p98
        $region18: #{tpu_custom_call.1} parent=11 // pred_check_branch
          %156 = sbr.rel (%p154) target = $region20
        $region19: #{tpu_custom_call.1} parent=11 // pred_region
          _
        $region20: #{tpu_custom_call.1} parent=11 // pred_fallthru
          _
      $region12: #{tpu_custom_call.1} parent=5 // pred_fallthru
        _
      %p157 = scmp.lt.s32.totalorder %s16, 2
      // Predicated region
      $region21: #{tpu_custom_call.1} parent=5 // pred_check
        %p158 = pneg %p157
      $region22: #{tpu_custom_call.1} parent=5 // pred_check_branch
        %160 = sbr.rel (%p158) target = $region24
      $region23: #{tpu_custom_call.1} parent=5 // pred_region
        // Predicated region
        $region25: #{tpu_custom_call.1} parent=23 // pred_check
          %p161 = pneg %p50
        $region26: #{tpu_custom_call.1} parent=23 // pred_check_branch
          %163 = sbr.rel (%p161) target = $region28
        $region27: #{tpu_custom_call.1} parent=23 // pred_region
          %s164 = sand.u32 %s40, 1
          %s165 = scalar_lea.sflag [#allocation3], %s164
          %s166 = sand.u32 %s40, 1
          %s167 = smul.addr %s166, 128
          %s168 = scalar_lea.vmem [#allocation2], %s167
          %s169 = smul.u32 16, %s24
          %s171 = ssub.s32 2048, 2048
          %172 = vsyncadd %s165, %s171
          %s173 = smul.addr %s23, 16
          %s174 = sadd.s32 %s169, %s173
          %s175 = smul.addr %s174, 128
          %s176 = scalar_lea.hbm %s0, %s175
          %s177 = sshll.u32 %s168, 4
          %s178 = int_to_ptr.vmem [resolvable:$true] %s177
          %183 = dma.hbm_to_vmem [thread:$0]  %s176, 2048, %s178, %s165, 128, 128, 8
        $region28: #{tpu_custom_call.1} parent=23 // pred_fallthru
          _
      $region24: #{tpu_custom_call.1} parent=5 // pred_fallthru
        _
      %p184 = scmp.le.s32.totalorder 1, %s16
      %p185 = scmp.lt.s32.totalorder %s16, 3
      %p186 = pnand %p184, %p185
      %p187 = pneg %p186
      // Predicated region
      $region29: #{tpu_custom_call.1} parent=5 // pred_check
        _
      $region30: #{tpu_custom_call.1} parent=5 // pred_check_branch
        %189 = sbr.rel (%p186) target = $region32
      $region31: #{tpu_custom_call.1} parent=5 // pred_region
        %s190 = ssub.s32 %s16, 1
        %s191 = sand.u32 %s43, 1
        %s192 = scalar_lea.sflag [#allocation3], %s191
        %s193 = sand.u32 %s43, 1
        %s194 = smul.addr %s193, 128
        %s195 = scalar_lea.vmem [#allocation2], %s194
        // Predicated region
        $region33: #{tpu_custom_call.1} parent=31 // pred_check
          %p196 = pneg %p56
        $region34: #{tpu_custom_call.1} parent=31 // pred_check_branch
          %198 = sbr.rel (%p196) target = $region36
        $region35: #{tpu_custom_call.1} parent=31 // pred_region
          %199 = dma.done %s192, 2048
        $region36: #{tpu_custom_call.1} parent=31 // pred_fallthru
          _
        // Predicated region
        $region37: #{tpu_custom_call.1} parent=31 // pred_check
          %p200 = pneg %p77
        $region38: #{tpu_custom_call.1} parent=31 // pred_check_branch
          %202 = sbr.rel (%p200) target = $region40
        $region39: #{tpu_custom_call.1} parent=31 // pred_region
          %203 = dma.done [#allocation6], 2048
        $region40: #{tpu_custom_call.1} parent=31 // pred_fallthru
          _
        %s204 = sand.u32 %s43, 1
        %s205 = scalar_lea.sflag [#allocation3], %s204
        %s206 = sand.u32 %s43, 1
        %s207 = smul.addr %s206, 128
        %s208 = scalar_lea.vmem [#allocation2], %s207
        %p209 = pneg %p56
        %p210 = pneg %p53
        %p211 = pneg %p77
        %p212 = pneg %p74
        %p213 = pneg %p98
        %p214 = pneg %p95
        %p215 = pneg %p126
        %p216 = pneg %p123
        %s217 = sand.u32 %s113, 1
        %s218 = scalar_lea.sflag [#allocation4], %s217
        %s219 = sand.u32 %s113, 1
        %s220 = smul.addr %s219, 128
        %s221 = scalar_lea.vmem [#allocation7], %s220
        %s222 = smul.u32 16, %s26
        %s223 = smul.u32 16, %s26
        %v224 = vld [vmem:[%s195] sm:$0xff]
        %v225 = vld [vmem:[%s195 + $0x8] sm:$0xff]
        %v226 = vld [vmem:[%s195 + $0x10] sm:$0xff]
        %v227 = vld [vmem:[%s195 + $0x18] sm:$0xff]
        %v228 = vld [vmem:[%s195 + $0x20] sm:$0xff]
        %v229 = vld [vmem:[%s195 + $0x28] sm:$0xff]
        %v230 = vld [vmem:[%s195 + $0x30] sm:$0xff]
        %v231 = vld [vmem:[%s195 + $0x38] sm:$0xff]
        %v232 = vld [vmem:[%s195 + $0x40] sm:$0xff]
        %v233 = vld [vmem:[%s195 + $0x48] sm:$0xff]
        %v234 = vld [vmem:[%s195 + $0x50] sm:$0xff]
        %v235 = vld [vmem:[%s195 + $0x58] sm:$0xff]
        %v236 = vld [vmem:[%s195 + $0x60] sm:$0xff]
        %v237 = vld [vmem:[%s195 + $0x68] sm:$0xff]
        %v238 = vld [vmem:[%s195 + $0x70] sm:$0xff]
        %v239 = vld [vmem:[%s195 + $0x78] sm:$0xff]
        %v240 = vld [vmem:[#allocation5] sm:$0xff]
        %v241 = vld [vmem:[#allocation5 + $0x8] sm:$0xff]
        %v242 = vld [vmem:[#allocation5 + $0x10] sm:$0xff]
        %v243 = vld [vmem:[#allocation5 + $0x18] sm:$0xff]
        %v244 = vld [vmem:[#allocation5 + $0x20] sm:$0xff]
        %v245 = vld [vmem:[#allocation5 + $0x28] sm:$0xff]
        %v246 = vld [vmem:[#allocation5 + $0x30] sm:$0xff]
        %v247 = vld [vmem:[#allocation5 + $0x38] sm:$0xff]
        %v248 = vld [vmem:[#allocation5 + $0x40] sm:$0xff]
        %v249 = vld [vmem:[#allocation5 + $0x48] sm:$0xff]
        %v250 = vld [vmem:[#allocation5 + $0x50] sm:$0xff]
        %v251 = vld [vmem:[#allocation5 + $0x58] sm:$0xff]
        %v252 = vld [vmem:[#allocation5 + $0x60] sm:$0xff]
        %v253 = vld [vmem:[#allocation5 + $0x68] sm:$0xff]
        %v254 = vld [vmem:[#allocation5 + $0x70] sm:$0xff]
        %v255 = vld [vmem:[#allocation5 + $0x78] sm:$0xff]
        %v256 = vld [vmem:[%s2] sm:$0x1]
        %v258 = vlaneseq
        %v259 = vshrl.u32 %v258, 7
        %v260 = vsub.s32 0, %v259
        %v261 = vrot.slane %v256, %v260
        %263 = vmatprep.subr.mxu0 0.0
        %264 = vmatpush1.msra.mxu0 %v240
        %265 = vmatprep.subr.mxu0 0.0
        %266 = vmatpush1.msra.mxu0 %v241
        %267 = vmatprep.subr.mxu0 0.0
        %268 = vmatpush1.msra.mxu0 %v242
        %269 = vmatprep.subr.mxu0 0.0
        %270 = vmatpush1.msra.mxu0 %v243
        %271 = vmatprep.subr.mxu0 0.0
        %272 = vmatpush1.msra.mxu0 %v244
        %273 = vmatprep.subr.mxu0 0.0
        %274 = vmatpush1.msra.mxu0 %v245
        %275 = vmatprep.subr.mxu0 0.0
        %276 = vmatpush1.msra.mxu0 %v246
        %277 = vmatprep.subr.mxu0 0.0
        %278 = vmatpush1.msra.mxu0 %v247
        %279 = vmatprep.subr.mxu0 0.0
        %280 = vmatpush1.msra.mxu0 %v248
        %281 = vmatprep.subr.mxu0 0.0
        %282 = vmatpush1.msra.mxu0 %v249
        %283 = vmatprep.subr.mxu0 0.0
        %284 = vmatpush1.msra.mxu0 %v250
        %285 = vmatprep.subr.mxu0 0.0
        %286 = vmatpush1.msra.mxu0 %v251
        %287 = vmatprep.subr.mxu0 0.0
        %288 = vmatpush1.msra.mxu0 %v252
        %289 = vmatprep.subr.mxu0 0.0
        %290 = vmatpush1.msra.mxu0 %v253
        %291 = vmatprep.subr.mxu0 0.0
        %292 = vmatpush1.msra.mxu0 %v254
        %293 = vmatprep.subr.mxu0 0.0
        %294 = vmatpush1.msra.mxu0 %v255
        %295 = vmatprep.subr.mxu0 0.0
        %296 = vmatpush1.msra.mxu0 0.0
        %297 = vmatprep.subr.mxu0 0.0
        %298 = vmatpush1.msra.mxu0 0.0
        %299 = vmatprep.subr.mxu0 0.0
        %300 = vmatpush1.msra.mxu0 0.0
        %301 = vmatprep.subr.mxu0 0.0
        %302 = vmatpush1.msra.mxu0 0.0
        %303 = vmatprep.subr.mxu0 0.0
        %304 = vmatpush1.msra.mxu0 0.0
        %305 = vmatprep.subr.mxu0 0.0
        %306 = vmatpush1.msra.mxu0 0.0
        %307 = vmatprep.subr.mxu0 0.0
        %308 = vmatpush1.msra.mxu0 0.0
        %309 = vmatprep.subr.mxu0 0.0
        %310 = vmatpush1.msra.mxu0 0.0
        %311 = vmatprep.subr.mxu0 0.0
        %312 = vmatpush1.msra.mxu0 0.0
        %313 = vmatprep.subr.mxu0 0.0
        %314 = vmatpush1.msra.mxu0 0.0
        %315 = vmatprep.subr.mxu0 0.0
        %316 = vmatpush1.msra.mxu0 0.0
        %317 = vmatprep.subr.mxu0 0.0
        %318 = vmatpush1.msra.mxu0 0.0
        %319 = vmatprep.subr.mxu0 0.0
        %320 = vmatpush1.msra.mxu0 0.0
        %321 = vmatprep.subr.mxu0 0.0
        %322 = vmatpush1.msra.mxu0 0.0
        %323 = vmatprep.subr.mxu0 0.0
        %324 = vmatpush1.msra.mxu0 0.0
        %325 = vmatprep.subr.mxu0 0.0
        %326 = vmatpush1.msra.mxu0 0.0
        %327 = vmatprep.mubr.f32.mxu0 0.0
        %328 = vmatmul.mubr.f32.gmra.mrb[0].mxu0 %v224
        %v329 = vpop.f32.mrb[0].mxu0
        %v330 = vadd.f32 %v261, %v329
        %v331 = vpop.f32.mrb[0].mxu0
        %332 = vmatprep.mubr.f32.mxu0 0.0
        %333 = vmatmul.mubr.f32.gmra.mrb[0].mxu0 %v225
        %v334 = vpop.f32.mrb[0].mxu0
        %v335 = vadd.f32 %v261, %v334
        %v336 = vpop.f32.mrb[0].mxu0
        %337 = vmatprep.mubr.f32.mxu0 0.0
        %338 = vmatmul.mubr.f32.gmra.mrb[0].mxu0 %v226
        %v339 = vpop.f32.mrb[0].mxu0
        %v340 = vadd.f32 %v261, %v339
        %v341 = vpop.f32.mrb[0].mxu0
        %342 = vmatprep.mubr.f32.mxu0 0.0
        %343 = vmatmul.mubr.f32.gmra.mrb[0].mxu0 %v227
        %v344 = vpop.f32.mrb[0].mxu0
        %v345 = vadd.f32 %v261, %v344
        %v346 = vpop.f32.mrb[0].mxu0
        %347 = vmatprep.mubr.f32.mxu0 0.0
        %348 = vmatmul.mubr.f32.gmra.mrb[0].mxu0 %v228
        %v349 = vpop.f32.mrb[0].mxu0
        %v350 = vadd.f32 %v261, %v349
        %v351 = vpop.f32.mrb[0].mxu0
        %352 = vmatprep.mubr.f32.mxu0 0.0
        %353 = vmatmul.mubr.f32.gmra.mrb[0].mxu0 %v229
        %v354 = vpop.f32.mrb[0].mxu0
        %v355 = vadd.f32 %v261, %v354
        %v356 = vpop.f32.mrb[0].mxu0
        %357 = vmatprep.mubr.f32.mxu0 0.0
        %358 = vmatmul.mubr.f32.gmra.mrb[0].mxu0 %v230
        %v359 = vpop.f32.mrb[0].mxu0
        %v360 = vadd.f32 %v261, %v359
        %v361 = vpop.f32.mrb[0].mxu0
        %362 = vmatprep.mubr.f32.mxu0 0.0
        %363 = vmatmul.mubr.f32.gmra.mrb[0].mxu0 %v231
        %v364 = vpop.f32.mrb[0].mxu0
        %v365 = vadd.f32 %v261, %v364
        %v366 = vpop.f32.mrb[0].mxu0
        %367 = vmatprep.mubr.f32.mxu0 0.0
        %368 = vmatmul.mubr.f32.gmra.mrb[0].mxu0 %v232
        %v369 = vpop.f32.mrb[0].mxu0
        %v370 = vadd.f32 %v261, %v369
        %v371 = vpop.f32.mrb[0].mxu0
        %372 = vmatprep.mubr.f32.mxu0 0.0
        %373 = vmatmul.mubr.f32.gmra.mrb[0].mxu0 %v233
        %v374 = vpop.f32.mrb[0].mxu0
        %v375 = vadd.f32 %v261, %v374
        %v376 = vpop.f32.mrb[0].mxu0
        %377 = vmatprep.mubr.f32.mxu0 0.0
        %378 = vmatmul.mubr.f32.gmra.mrb[0].mxu0 %v234
        %v379 = vpop.f32.mrb[0].mxu0
        %v380 = vadd.f32 %v261, %v379
        %v381 = vpop.f32.mrb[0].mxu0
        %382 = vmatprep.mubr.f32.mxu0 0.0
        %383 = vmatmul.mubr.f32.gmra.mrb[0].mxu0 %v235
        %v384 = vpop.f32.mrb[0].mxu0
        %v385 = vadd.f32 %v261, %v384
        %v386 = vpop.f32.mrb[0].mxu0
        %387 = vmatprep.mubr.f32.mxu0 0.0
        %388 = vmatmul.mubr.f32.gmra.mrb[0].mxu0 %v236
        %v389 = vpop.f32.mrb[0].mxu0
        %v390 = vadd.f32 %v261, %v389
        %v391 = vpop.f32.mrb[0].mxu0
        %392 = vmatprep.mubr.f32.mxu0 0.0
        %393 = vmatmul.mubr.f32.gmra.mrb[0].mxu0 %v237
        %v394 = vpop.f32.mrb[0].mxu0
        %v395 = vadd.f32 %v261, %v394
        %v396 = vpop.f32.mrb[0].mxu0
        %397 = vmatprep.mubr.f32.mxu0 0.0
        %398 = vmatmul.mubr.f32.gmra.mrb[0].mxu0 %v238
        %v399 = vpop.f32.mrb[0].mxu0
        %v400 = vadd.f32 %v261, %v399
        %v401 = vpop.f32.mrb[0].mxu0
        %402 = vmatprep.mubr.f32.mxu0 0.0
        %403 = vmatmul.mubr.f32.gmra.mrb[0].mxu0 %v239
        %v404 = vpop.f32.mrb[0].mxu0
        %v405 = vadd.f32 %v261, %v404
        %v406 = vpop.f32.mrb[0].mxu0
        %407 = vdwg.mxu0
        %408 = vst [vmem:[%s221] sm:$0xff] %v330
        %409 = vst [vmem:[%s221 + $0x8] sm:$0xff] %v335
        %410 = vst [vmem:[%s221 + $0x10] sm:$0xff] %v340
        %411 = vst [vmem:[%s221 + $0x18] sm:$0xff] %v345
        %412 = vst [vmem:[%s221 + $0x20] sm:$0xff] %v350
        %413 = vst [vmem:[%s221 + $0x28] sm:$0xff] %v355
        %414 = vst [vmem:[%s221 + $0x30] sm:$0xff] %v360
        %415 = vst [vmem:[%s221 + $0x38] sm:$0xff] %v365
        %416 = vst [vmem:[%s221 + $0x40] sm:$0xff] %v370
        %417 = vst [vmem:[%s221 + $0x48] sm:$0xff] %v375
        %418 = vst [vmem:[%s221 + $0x50] sm:$0xff] %v380
        %419 = vst [vmem:[%s221 + $0x58] sm:$0xff] %v385
        %420 = vst [vmem:[%s221 + $0x60] sm:$0xff] %v390
        %421 = vst [vmem:[%s221 + $0x68] sm:$0xff] %v395
        %422 = vst [vmem:[%s221 + $0x70] sm:$0xff] %v400
        %423 = vst [vmem:[%s221 + $0x78] sm:$0xff] %v405
        %s424 = sand.u32 %s113, 1
        %s425 = scalar_lea.sflag [#allocation4], %s424
        %s426 = sand.u32 %s113, 1
        %s427 = smul.addr %s426, 128
        %s428 = scalar_lea.vmem [#allocation7], %s427
        // Predicated region
        $region41: #{tpu_custom_call.1} parent=31 // pred_check
          %p429 = pneg %p123
        $region42: #{tpu_custom_call.1} parent=31 // pred_check_branch
          %431 = sbr.rel (%p429) target = $region44
        $region43: #{tpu_custom_call.1} parent=31 // pred_region
          %s432 = smul.u32 16, %s26
          %s434 = ssub.s32 2048, 2048
          %435 = vsyncadd %s425, %s434
          %s436 = smul.addr %s25, 16
          %s437 = sadd.s32 %s432, %s436
          %s438 = smul.addr %s437, 128
          %s439 = scalar_lea.hbm %s3, %s438
          %s440 = sshll.u32 %s428, 4
          %s441 = int_to_ptr.vmem [resolvable:$true] %s440
          %446 = dma.vmem_to_hbm [thread:$0]  %s441, 2048, %s439, %s425, 128, 128, 8
        $region44: #{tpu_custom_call.1} parent=31 // pred_fallthru
          _
      $region32: #{tpu_custom_call.1} parent=5 // pred_fallthru
        _
      %p447 = scmp.le.s32.totalorder 2, %s16
      // Predicated region
      $region45: #{tpu_custom_call.1} parent=5 // pred_check
        %p448 = pneg %p447
      $region46: #{tpu_custom_call.1} parent=5 // pred_check_branch
        %450 = sbr.rel (%p448) target = $region48
      $region47: #{tpu_custom_call.1} parent=5 // pred_region
        %s451 = ssub.s32 %s16, 2
        // Predicated region
        $region49: #{tpu_custom_call.1} parent=47 // pred_check
          %p452 = pneg %p129
        $region50: #{tpu_custom_call.1} parent=47 // pred_check_branch
          %454 = sbr.rel (%p452) target = $region52
        $region51: #{tpu_custom_call.1} parent=47 // pred_region
          %s455 = sand.u32 %s114, 1
          %s456 = scalar_lea.sflag [#allocation4], %s455
          %s457 = sand.u32 %s114, 1
          %s458 = smul.addr %s457, 128
          %s459 = scalar_lea.vmem [#allocation7], %s458
          %460 = dma.done %s456, 2048
        $region52: #{tpu_custom_call.1} parent=47 // pred_fallthru
          _
      $region48: #{tpu_custom_call.1} parent=5 // pred_fallthru
        _
    $region6: #{tpu_custom_call.1} parent=1 // loop_footer
      %s20 = sadd.s32 1, %s16
    $region7: #{tpu_custom_call.1} parent=1 // loop_footer_branch
      %15 = sbr.rel target = $region3
    $region8: #{tpu_custom_call.1} parent=1 // loop_exit
      _
    %461 = vsyncpa [#allocation3], 1
    %s462 = scalar_lea.sflag [#allocation3], 1
    %463 = vsyncpa %s462, 1
    %464 = vsyncpa [#allocation6], 1
    %465 = vsyncpa [#allocation4], 1
    %s466 = scalar_lea.sflag [#allocation4], 1
    %467 = vsyncpa %s466, 1

</llo_original>
